<compile_context>
chip_gen: v7x
topology: tpu7x:2x2x1
jax: 0.10.0
libtpu: 0.0.40
codegen_flags: <defaults>
</compile_context>

<pallas_src>
import jax
import jax.numpy as jnp
from jax.experimental import pallas as pl
from jax.experimental.pallas import tpu as pltpu

_LANE = 128     # TPU lane width
_SUBLANE = 8    # TPU sublane count


def _single_head_kernel(x_ref, ws_ref, wh_ref, o_ref):
    """Fused trunk + selected head.

    Weight refs are bf16 "augmented" matrices: the bias is stored as row [K]
    of the packed buffer (rows padded to a multiple of 8 sublanes), so the
    kernel needs only 3 inputs (3 HBM->VMEM DMAs instead of 5).
    """
    k = x_ref.shape[1]        # trunk contraction dim (static)
    h_dim = ws_ref.shape[1]   # hidden width == head contraction dim (static)

    # x arrives in f32; cast to bf16 in-kernel for the MXU (free VPU work).
    x = x_ref[...].astype(jnp.bfloat16)

    # Shared trunk: bf16 operands, f32 accumulation on the MXU.
    h = jnp.dot(x, ws_ref[:k, :], preferred_element_type=jnp.float32)
    # Bias add + ReLU in f32 (keep elementwise math off bf16 for v5e's VPU).
    h = jnp.maximum(h + ws_ref[k:k + 1, :].astype(jnp.float32), 0.0)

    # Selected head only; weight lane-padded to 128 -> one unmasked store.
    y = jnp.dot(h.astype(jnp.bfloat16), wh_ref[:h_dim, :],
                preferred_element_type=jnp.float32)
    o_ref[...] = y + wh_ref[h_dim:h_dim + 1, :].astype(jnp.float32)


def fused_single_head(x_flat, ws_packed, wh_packed):
    """Single invocation, full-array VMEM blocks, no grid (latency-bound)."""
    B = x_flat.shape[0]
    out_pad = wh_packed.shape[1]
    vmem = pl.BlockSpec(memory_space=pltpu.MemorySpace.VMEM)
    return pl.pallas_call(
        _single_head_kernel,
        out_shape=jax.ShapeDtypeStruct((B, out_pad), jnp.float32),
        in_specs=[vmem, vmem, vmem],
        out_specs=vmem,
    )(x_flat, ws_packed, wh_packed)


def _pack_weight_and_bias(w, b, lane_pad_to=None):
    """Fold bias into the weight as its last row (augmented-matrix trick),
    pad rows up to a multiple of 8 sublanes (zeros), optionally lane-pad the
    output dim, and store everything as one bf16 buffer (one DMA)."""
    k, n = w.shape
    if lane_pad_to is not None:
        pad_n = (-n) % lane_pad_to
        w = jnp.pad(w, ((0, 0), (0, pad_n)))
        b = jnp.pad(b, ((0, 0), (0, pad_n)))
    packed = jnp.concatenate([w, b], axis=0)            # bias lives at row k
    pad_rows = (-(k + 1)) % _SUBLANE
    packed = jnp.pad(packed, ((0, pad_rows), (0, 0)))
    return packed.astype(jnp.bfloat16)


class SingleOutputWrapperPallas:
    """Mirrors SingleOutputWrapper.forward: returns model(x)[output_index].

    output_index is known at construction, so only the selected head's
    parameters are packed and fed to the kernel (no dead compute/writeback).
    """

    def __init__(self, params, output_index=0):
        ws, bs, heads = params          # heads: list of (w, b) per task
        self.output_index = output_index
        w_sel, b_sel = heads[output_index]
        self.in_dim = ws.shape[0]
        self.out_dim = w_sel.shape[1]

        # 2 packed bf16 weight buffers (bias folded in) -> 3 kernel inputs.
        self.ws_packed = _pack_weight_and_bias(ws, bs)
        self.wh_packed = _pack_weight_and_bias(w_sel, b_sel, lane_pad_to=_LANE)

        out_dim = self.out_dim

        def _forward(x_nchw, ws_p, wh_p):
            # All glue (NCHW flatten, kernel call, lane-pad slice) inside one
            # jit: one dispatch; the in-kernel cast removes the eager bf16 cast.
            b = x_nchw.shape[0]
            x_flat = x_nchw.reshape(b, -1)       # stays f32; cast in-kernel
            y_pad = fused_single_head(x_flat, ws_p, wh_p)
            return y_pad[:, :out_dim]

        self._fwd = jax.jit(_forward)

    def __call__(self, x_nchw):
        return self._fwd(x_nchw, self.ws_packed, self.wh_packed)


def init_params(key, in_dim, hidden, out0, out1):
    k1, k2, k3 = jax.random.split(key, 3)
    ws = jax.random.normal(k1, (in_dim, hidden), jnp.float32) * 0.02
    bs = jnp.zeros((1, hidden), jnp.float32)
    w0 = jax.random.normal(k2, (hidden, out0), jnp.float32) * 0.1
    b0 = jnp.zeros((1, out0), jnp.float32)
    w1 = jax.random.normal(k3, (hidden, out1), jnp.float32) * 0.1
    b1 = jnp.zeros((1, out1), jnp.float32)
    return (ws, bs, [(w0, b0), (w1, b1)])


if __name__ == "__main__":
    key = jax.random.PRNGKey(0)
    kx, kp = jax.random.split(key)

    # Small NCHW input consistent with a conv-style multi-task model.
    B, C, H, W = 2, 4, 16, 16
    x = jax.random.normal(kx, (B, C, H, W), jnp.float32)

    in_dim = C * H * W          # 1024
    hidden = 32                 # NOTE: a 128-wide hidden would fill the MXU better
    out0, out1 = 8, 8
    params = init_params(kp, in_dim, hidden, out0, out1)

    wrapped = SingleOutputWrapperPallas(params, output_index=0)
    y = jax.block_until_ready(wrapped(x))

    # Reference in plain JAX with the same bf16-weight / f32-accum math.
    ws_p, wh_p = wrapped.ws_packed, wrapped.wh_packed
    x_bf = x.reshape(B, -1).astype(jnp.bfloat16)
    h_ref = jnp.maximum(
        jnp.dot(x_bf, ws_p[:in_dim], preferred_element_type=jnp.float32)
        + ws_p[in_dim:in_dim + 1].astype(jnp.float32), 0.0)
    y_ref = (jnp.dot(h_ref.astype(jnp.bfloat16), wh_p[:hidden],
                     preferred_element_type=jnp.float32)
             + wh_p[hidden:hidden + 1].astype(jnp.float32))[:, :out0]

    assert y.shape == (B, out0)
    assert jnp.allclose(y, y_ref, atol=1e-2, rtol=1e-2)

    print("KERNEL_OK")
</pallas_src>

<mosaic_0001>
module attributes {stable_mosaic.version = 11 : i64} {
  func.func @_single_head_kernel(%arg0: memref<2x1024xf32, #tpu.memory_space<vmem>>, %arg1: memref<1032x32xbf16, #tpu.memory_space<vmem>>, %arg2: memref<40x128xbf16, #tpu.memory_space<vmem>>, %arg3: memref<2x128xf32, #tpu.memory_space<vmem>>) attributes {dimension_semantics = [], scalar_prefetch = 0 : i64, scratch_operands = 0 : i64, tpu.core_type = #tpu.core_type<tc>} {
    %c0 = arith.constant 0 : index
    %c0_0 = arith.constant 0 : index
    %0 = vector.load %arg0[%c0, %c0_0] : memref<2x1024xf32, #tpu.memory_space<vmem>>, vector<2x1024xf32>
    %1 = arith.truncf %0 : vector<2x1024xf32> to vector<2x1024xbf16>
    %c0_1 = arith.constant 0 : index
    %c0_2 = arith.constant 0 : index
    %2 = vector.load %arg1[%c0_1, %c0_2] : memref<1032x32xbf16, #tpu.memory_space<vmem>>, vector<1024x32xbf16>
    %cst = arith.constant dense<0.000000e+00> : vector<2x32xf32>
    %3 = tpu.matmul %1, %2, %cst {dimension_numbers = #tpu.dot_dimension_numbers<[1], [0], [0], [1], [0, 0, 1, 1], [], []>} : vector<2x1024xbf16>, vector<1024x32xbf16>, vector<2x32xf32> -> vector<2x32xf32>
    %c1024 = arith.constant 1024 : index
    %c0_3 = arith.constant 0 : index
    %4 = vector.load %arg1[%c1024, %c0_3] : memref<1032x32xbf16, #tpu.memory_space<vmem>>, vector<1x32xbf16>
    %5 = arith.extf %4 : vector<1x32xbf16> to vector<1x32xf32>
    %6 = vector.broadcast %5 : vector<1x32xf32> to vector<2x32xf32>
    %7 = arith.addf %3, %6 : vector<2x32xf32>
    %cst_4 = arith.constant 0.000000e+00 : f32
    %8 = vector.broadcast %cst_4 : f32 to vector<2x32xf32>
    %9 = arith.maximumf %7, %8 : vector<2x32xf32>
    %10 = arith.truncf %9 : vector<2x32xf32> to vector<2x32xbf16>
    %c0_5 = arith.constant 0 : index
    %c0_6 = arith.constant 0 : index
    %11 = vector.load %arg2[%c0_5, %c0_6] : memref<40x128xbf16, #tpu.memory_space<vmem>>, vector<32x128xbf16>
    %cst_7 = arith.constant dense<0.000000e+00> : vector<2x128xf32>
    %12 = tpu.matmul %10, %11, %cst_7 {dimension_numbers = #tpu.dot_dimension_numbers<[1], [0], [0], [1], [0, 0, 1, 1], [], []>} : vector<2x32xbf16>, vector<32x128xbf16>, vector<2x128xf32> -> vector<2x128xf32>
    %c32 = arith.constant 32 : index
    %c0_8 = arith.constant 0 : index
    %13 = vector.load %arg2[%c32, %c0_8] : memref<40x128xbf16, #tpu.memory_space<vmem>>, vector<1x128xbf16>
    %14 = arith.extf %13 : vector<1x128xbf16> to vector<1x128xf32>
    %15 = vector.broadcast %14 : vector<1x128xf32> to vector<2x128xf32>
    %16 = arith.addf %12, %15 : vector<2x128xf32>
    %c0_9 = arith.constant 0 : index
    %c0_10 = arith.constant 0 : index
    %17 = vector.load %arg3[%c0_9, %c0_10] : memref<2x128xf32, #tpu.memory_space<vmem>>, vector<2x128xf32>
    tpu.vector_store %arg3[%c0_9, %c0_10], %16 {strides = array<i32>} : memref<2x128xf32, #tpu.memory_space<vmem>>, vector<2x128xf32>,
    return
  }
}

</mosaic_0001>

<llo_original>
// kernel: _forward.1
$region0: #{_forward.1}
  #allocation0 [shape = 'u32[]', space=smem, size = 0x4, offset = 0x4, fixed_abs, tag = 'smem constant byte address 0x4 - core index']
  #allocation1 [shape = 'u32[144,128]{1,0:T(1,128)}', space=vmem, size = 0x12000, scoped, tag = 'internal scratch']
  %s0 = inlined_call_operand.vmem [shape: f32[2,1024], index: 0, kind: input, shape index: {}]
  %s1 = inlined_call_operand.vmem [shape: bf16[1032,32], index: 1, kind: input, shape index: {}]
  %s2 = inlined_call_operand.vmem [shape: bf16[40,128], index: 2, kind: input, shape index: {}]
  %s3 = inlined_call_operand.hbm [shape: f32[2,128], index: 3, kind: output, shape index: {}]
  %s4 = sld [smem:[#allocation0]]
  $region22: #{_forward.1} parent=0
    _
  %s6 = ssub.s32 1, %s4
  %s7 = scalar_select 0, %s6, %s4
  $region1: #{_forward.1} parent=0
    #allocation2 [shape = 'u8[1024]{0}', space=vmem, size = 0x400, scoped, tag = 'output window, operand 0, single buffered']
    #allocation3 [shape = 's32[1]{0}', space=sflag, size = 0x4, scoped, tag = 'scoped memory for _forward.1']
    %8 = vsyncpa [#allocation3], 0
    // Predicated region
    $region2: #{_forward.1} parent=1 // pred_check
      _
    $region3: #{_forward.1} parent=1 // pred_check_branch
      %10 = sbr.rel (0) target = $region5
    $region4: #{_forward.1} parent=1 // pred_region
      _
    $region5: #{_forward.1} parent=1 // pred_fallthru
      _
    // Predicated region
    $region6: #{_forward.1} parent=1 // pred_check
      _
    $region7: #{_forward.1} parent=1 // pred_check_branch
      %12 = sbr.rel (0) target = $region9
    $region8: #{_forward.1} parent=1 // pred_region
      _
    $region9: #{_forward.1} parent=1 // pred_fallthru
      _
    // Predicated region
    $region10: #{_forward.1} parent=1 // pred_check
      _
    $region11: #{_forward.1} parent=1 // pred_check_branch
      %14 = sbr.rel (0) target = $region13
    $region12: #{_forward.1} parent=1 // pred_region
      _
    $region13: #{_forward.1} parent=1 // pred_fallthru
      _
    %v16 = vld [vmem:[%s0] sm:$0xff]
    %v17 = vld [vmem:[%s0 + $0x8] sm:$0xff]
    %v20 = vcombine.high %v16, %v16
    %v22 = vunpack.c.l.s4 1983009808
    %v23 = vunpack.c.0.s8 %v22
    %v24 = vlaneseq
    %v25 = vshrl.u32 %v24, 7
    %v26 = vsub.s32 %v23, %v25
    %v27 = vrot.slane %v16, %v26
    %v29 = vunpack.c.l.s4 1983009808
    %v30 = vunpack.c.0.s8 %v29
    %v31 = vlaneseq
    %v32 = vshrl.u32 %v31, 7
    %v33 = vsub.s32 %v30, %v32
    %v34 = vrot.slane %v20, %v33
    %v35 = vcombine.high %v27, %v27
    %v36 = vcombine.high %v34, %v34
    %v37 = vcombine.high %v17, %v17
    %v39 = vunpack.c.l.s4 1983009808
    %v40 = vunpack.c.0.s8 %v39
    %v41 = vlaneseq
    %v42 = vshrl.u32 %v41, 7
    %v43 = vsub.s32 %v40, %v42
    %v44 = vrot.slane %v17, %v43
    %v46 = vunpack.c.l.s4 1983009808
    %v47 = vunpack.c.0.s8 %v46
    %v48 = vlaneseq
    %v49 = vshrl.u32 %v48, 7
    %v50 = vsub.s32 %v47, %v49
    %v51 = vrot.slane %v37, %v50
    %v52 = vcombine.high %v44, %v44
    %v53 = vcombine.high %v51, %v51
    %v62 = vpack.c.bf16 %v27, %v27
    %v63 = vpack.c.bf16 %v35, %v35
    %v64 = vpack.c.bf16 %v34, %v34
    %v65 = vpack.c.bf16 %v36, %v36
    %v66 = vpack.c.bf16 %v44, %v44
    %v67 = vpack.c.bf16 %v52, %v52
    %v68 = vpack.c.bf16 %v51, %v51
    %v69 = vpack.c.bf16 %v53, %v53
    %v70 = vld [vmem:[%s1] sm:$0xf]
    %v71 = vld [vmem:[%s1 + $0x4] sm:$0xf]
    %v72 = vld [vmem:[%s1 + $0x8] sm:$0xf]
    %v73 = vld [vmem:[%s1 + $0xc] sm:$0xf]
    %v74 = vld [vmem:[%s1 + $0x10] sm:$0xf]
    %v75 = vld [vmem:[%s1 + $0x14] sm:$0xf]
    %v76 = vld [vmem:[%s1 + $0x18] sm:$0xf]
    %v77 = vld [vmem:[%s1 + $0x1c] sm:$0xf]
    %v78 = vld [vmem:[%s1 + $0x20] sm:$0xf]
    %v79 = vld [vmem:[%s1 + $0x24] sm:$0xf]
    %v80 = vld [vmem:[%s1 + $0x28] sm:$0xf]
    %v81 = vld [vmem:[%s1 + $0x2c] sm:$0xf]
    %v82 = vld [vmem:[%s1 + $0x30] sm:$0xf]
    %v83 = vld [vmem:[%s1 + $0x34] sm:$0xf]
    %v84 = vld [vmem:[%s1 + $0x38] sm:$0xf]
    %v85 = vld [vmem:[%s1 + $0x3c] sm:$0xf]
    %v86 = vld [vmem:[%s1 + $0x40] sm:$0xf]
    %v87 = vld [vmem:[%s1 + $0x44] sm:$0xf]
    %v88 = vld [vmem:[%s1 + $0x48] sm:$0xf]
    %v89 = vld [vmem:[%s1 + $0x4c] sm:$0xf]
    %v90 = vld [vmem:[%s1 + $0x50] sm:$0xf]
    %v91 = vld [vmem:[%s1 + $0x54] sm:$0xf]
    %v92 = vld [vmem:[%s1 + $0x58] sm:$0xf]
    %v93 = vld [vmem:[%s1 + $0x5c] sm:$0xf]
    %v94 = vld [vmem:[%s1 + $0x60] sm:$0xf]
    %v95 = vld [vmem:[%s1 + $0x64] sm:$0xf]
    %v96 = vld [vmem:[%s1 + $0x68] sm:$0xf]
    %v97 = vld [vmem:[%s1 + $0x6c] sm:$0xf]
    %v98 = vld [vmem:[%s1 + $0x70] sm:$0xf]
    %v99 = vld [vmem:[%s1 + $0x74] sm:$0xf]
    %v100 = vld [vmem:[%s1 + $0x78] sm:$0xf]
    %v101 = vld [vmem:[%s1 + $0x7c] sm:$0xf]
    %v102 = vld [vmem:[%s1 + $0x80] sm:$0xf]
    %v103 = vld [vmem:[%s1 + $0x84] sm:$0xf]
    %v104 = vld [vmem:[%s1 + $0x88] sm:$0xf]
    %v105 = vld [vmem:[%s1 + $0x8c] sm:$0xf]
    %v106 = vld [vmem:[%s1 + $0x90] sm:$0xf]
    %v107 = vld [vmem:[%s1 + $0x94] sm:$0xf]
    %v108 = vld [vmem:[%s1 + $0x98] sm:$0xf]
    %v109 = vld [vmem:[%s1 + $0x9c] sm:$0xf]
    %v110 = vld [vmem:[%s1 + $0xa0] sm:$0xf]
    %v111 = vld [vmem:[%s1 + $0xa4] sm:$0xf]
    %v112 = vld [vmem:[%s1 + $0xa8] sm:$0xf]
    %v113 = vld [vmem:[%s1 + $0xac] sm:$0xf]
    %v114 = vld [vmem:[%s1 + $0xb0] sm:$0xf]
    %v115 = vld [vmem:[%s1 + $0xb4] sm:$0xf]
    %v116 = vld [vmem:[%s1 + $0xb8] sm:$0xf]
    %v117 = vld [vmem:[%s1 + $0xbc] sm:$0xf]
    %v118 = vld [vmem:[%s1 + $0xc0] sm:$0xf]
    %v119 = vld [vmem:[%s1 + $0xc4] sm:$0xf]
    %v120 = vld [vmem:[%s1 + $0xc8] sm:$0xf]
    %v121 = vld [vmem:[%s1 + $0xcc] sm:$0xf]
    %v122 = vld [vmem:[%s1 + $0xd0] sm:$0xf]
    %v123 = vld [vmem:[%s1 + $0xd4] sm:$0xf]
    %v124 = vld [vmem:[%s1 + $0xd8] sm:$0xf]
    %v125 = vld [vmem:[%s1 + $0xdc] sm:$0xf]
    %v126 = vld [vmem:[%s1 + $0xe0] sm:$0xf]
    %v127 = vld [vmem:[%s1 + $0xe4] sm:$0xf]
    %v128 = vld [vmem:[%s1 + $0xe8] sm:$0xf]
    %v129 = vld [vmem:[%s1 + $0xec] sm:$0xf]
    %v130 = vld [vmem:[%s1 + $0xf0] sm:$0xf]
    %v131 = vld [vmem:[%s1 + $0xf4] sm:$0xf]
    %v132 = vld [vmem:[%s1 + $0xf8] sm:$0xf]
    %v133 = vld [vmem:[%s1 + $0xfc] sm:$0xf]
    %v134 = vld [vmem:[%s1 + $0x100] sm:$0xf]
    %v135 = vld [vmem:[%s1 + $0x104] sm:$0xf]
    %v136 = vld [vmem:[%s1 + $0x108] sm:$0xf]
    %v137 = vld [vmem:[%s1 + $0x10c] sm:$0xf]
    %v138 = vld [vmem:[%s1 + $0x110] sm:$0xf]
    %v139 = vld [vmem:[%s1 + $0x114] sm:$0xf]
    %v140 = vld [vmem:[%s1 + $0x118] sm:$0xf]
    %v141 = vld [vmem:[%s1 + $0x11c] sm:$0xf]
    %v142 = vld [vmem:[%s1 + $0x120] sm:$0xf]
    %v143 = vld [vmem:[%s1 + $0x124] sm:$0xf]
    %v144 = vld [vmem:[%s1 + $0x128] sm:$0xf]
    %v145 = vld [vmem:[%s1 + $0x12c] sm:$0xf]
    %v146 = vld [vmem:[%s1 + $0x130] sm:$0xf]
    %v147 = vld [vmem:[%s1 + $0x134] sm:$0xf]
    %v148 = vld [vmem:[%s1 + $0x138] sm:$0xf]
    %v149 = vld [vmem:[%s1 + $0x13c] sm:$0xf]
    %v150 = vld [vmem:[%s1 + $0x140] sm:$0xf]
    %v151 = vld [vmem:[%s1 + $0x144] sm:$0xf]
    %v152 = vld [vmem:[%s1 + $0x148] sm:$0xf]
    %v153 = vld [vmem:[%s1 + $0x14c] sm:$0xf]
    %v154 = vld [vmem:[%s1 + $0x150] sm:$0xf]
    %v155 = vld [vmem:[%s1 + $0x154] sm:$0xf]
    %v156 = vld [vmem:[%s1 + $0x158] sm:$0xf]
    %v157 = vld [vmem:[%s1 + $0x15c] sm:$0xf]
    %v158 = vld [vmem:[%s1 + $0x160] sm:$0xf]
    %v159 = vld [vmem:[%s1 + $0x164] sm:$0xf]
    %v160 = vld [vmem:[%s1 + $0x168] sm:$0xf]
    %v161 = vld [vmem:[%s1 + $0x16c] sm:$0xf]
    %v162 = vld [vmem:[%s1 + $0x170] sm:$0xf]
    %v163 = vld [vmem:[%s1 + $0x174] sm:$0xf]
    %v164 = vld [vmem:[%s1 + $0x178] sm:$0xf]
    %v165 = vld [vmem:[%s1 + $0x17c] sm:$0xf]
    %v166 = vld [vmem:[%s1 + $0x180] sm:$0xf]
    %v167 = vld [vmem:[%s1 + $0x184] sm:$0xf]
    %v168 = vld [vmem:[%s1 + $0x188] sm:$0xf]
    %v169 = vld [vmem:[%s1 + $0x18c] sm:$0xf]
    %v170 = vld [vmem:[%s1 + $0x190] sm:$0xf]
    %v171 = vld [vmem:[%s1 + $0x194] sm:$0xf]
    %v172 = vld [vmem:[%s1 + $0x198] sm:$0xf]
    %v173 = vld [vmem:[%s1 + $0x19c] sm:$0xf]
    %v174 = vld [vmem:[%s1 + $0x1a0] sm:$0xf]
    %v175 = vld [vmem:[%s1 + $0x1a4] sm:$0xf]
    %v176 = vld [vmem:[%s1 + $0x1a8] sm:$0xf]
    %v177 = vld [vmem:[%s1 + $0x1ac] sm:$0xf]
    %v178 = vld [vmem:[%s1 + $0x1b0] sm:$0xf]
    %v179 = vld [vmem:[%s1 + $0x1b4] sm:$0xf]
    %v180 = vld [vmem:[%s1 + $0x1b8] sm:$0xf]
    %v181 = vld [vmem:[%s1 + $0x1bc] sm:$0xf]
    %v182 = vld [vmem:[%s1 + $0x1c0] sm:$0xf]
    %v183 = vld [vmem:[%s1 + $0x1c4] sm:$0xf]
    %v184 = vld [vmem:[%s1 + $0x1c8] sm:$0xf]
    %v185 = vld [vmem:[%s1 + $0x1cc] sm:$0xf]
    %v186 = vld [vmem:[%s1 + $0x1d0] sm:$0xf]
    %v187 = vld [vmem:[%s1 + $0x1d4] sm:$0xf]
    %v188 = vld [vmem:[%s1 + $0x1d8] sm:$0xf]
    %v189 = vld [vmem:[%s1 + $0x1dc] sm:$0xf]
    %v190 = vld [vmem:[%s1 + $0x1e0] sm:$0xf]
    %v191 = vld [vmem:[%s1 + $0x1e4] sm:$0xf]
    %v192 = vld [vmem:[%s1 + $0x1e8] sm:$0xf]
    %v193 = vld [vmem:[%s1 + $0x1ec] sm:$0xf]
    %v194 = vld [vmem:[%s1 + $0x1f0] sm:$0xf]
    %v195 = vld [vmem:[%s1 + $0x1f4] sm:$0xf]
    %v196 = vld [vmem:[%s1 + $0x1f8] sm:$0xf]
    %v197 = vld [vmem:[%s1 + $0x1fc] sm:$0xf]
    %v198 = vld [vmem:[%s1 + $0x200] sm:$0x1]
    %v199 = vunpack.c.l.bf16 %v198
    %v200 = vlaneseq
    %v201 = vshrl.u32 %v200, 7
    %v202 = vsub.s32 0, %v201
    %v203 = vrot.slane %v199, %v202
    %v332 = vunpack.c.l.b16 %v70
    %v333 = vunpack.c.l.b16 %v71
    %v334 = vunpack.c.l.b16 %v72
    %v335 = vunpack.c.l.b16 %v73
    %v336 = vunpack.c.l.b16 %v74
    %v337 = vunpack.c.l.b16 %v75
    %v338 = vunpack.c.l.b16 %v76
    %v339 = vunpack.c.l.b16 %v77
    %v340 = vunpack.c.l.b16 %v78
    %v341 = vunpack.c.l.b16 %v79
    %v342 = vunpack.c.l.b16 %v80
    %v343 = vunpack.c.l.b16 %v81
    %v344 = vunpack.c.l.b16 %v82
    %v345 = vunpack.c.l.b16 %v83
    %v346 = vunpack.c.l.b16 %v84
    %v347 = vunpack.c.l.b16 %v85
    %v348 = vunpack.c.l.b16 %v86
    %v349 = vunpack.c.l.b16 %v87
    %v350 = vunpack.c.l.b16 %v88
    %v351 = vunpack.c.l.b16 %v89
    %v352 = vunpack.c.l.b16 %v90
    %v353 = vunpack.c.l.b16 %v91
    %v354 = vunpack.c.l.b16 %v92
    %v355 = vunpack.c.l.b16 %v93
    %v356 = vunpack.c.l.b16 %v94
    %v357 = vunpack.c.l.b16 %v95
    %v358 = vunpack.c.l.b16 %v96
    %v359 = vunpack.c.l.b16 %v97
    %v360 = vunpack.c.l.b16 %v98
    %v361 = vunpack.c.l.b16 %v99
    %v362 = vunpack.c.l.b16 %v100
    %v363 = vunpack.c.l.b16 %v101
    %v364 = vunpack.c.l.b16 %v102
    %v365 = vunpack.c.l.b16 %v103
    %v366 = vunpack.c.l.b16 %v104
    %v367 = vunpack.c.l.b16 %v105
    %v368 = vunpack.c.l.b16 %v106
    %v369 = vunpack.c.l.b16 %v107
    %v370 = vunpack.c.l.b16 %v108
    %v371 = vunpack.c.l.b16 %v109
    %v372 = vunpack.c.l.b16 %v110
    %v373 = vunpack.c.l.b16 %v111
    %v374 = vunpack.c.l.b16 %v112
    %v375 = vunpack.c.l.b16 %v113
    %v376 = vunpack.c.l.b16 %v114
    %v377 = vunpack.c.l.b16 %v115
    %v378 = vunpack.c.l.b16 %v116
    %v379 = vunpack.c.l.b16 %v117
    %v380 = vunpack.c.l.b16 %v118
    %v381 = vunpack.c.l.b16 %v119
    %v382 = vunpack.c.l.b16 %v120
    %v383 = vunpack.c.l.b16 %v121
    %v384 = vunpack.c.l.b16 %v122
    %v385 = vunpack.c.l.b16 %v123
    %v386 = vunpack.c.l.b16 %v124
    %v387 = vunpack.c.l.b16 %v125
    %v388 = vunpack.c.l.b16 %v126
    %v389 = vunpack.c.l.b16 %v127
    %v390 = vunpack.c.l.b16 %v128
    %v391 = vunpack.c.l.b16 %v129
    %v392 = vunpack.c.l.b16 %v130
    %v393 = vunpack.c.l.b16 %v131
    %v394 = vunpack.c.l.b16 %v132
    %v395 = vunpack.c.l.b16 %v133
    %v396 = vunpack.c.l.b16 %v134
    %v397 = vunpack.c.l.b16 %v135
    %v398 = vunpack.c.l.b16 %v136
    %v399 = vunpack.c.l.b16 %v137
    %v400 = vunpack.c.l.b16 %v138
    %v401 = vunpack.c.l.b16 %v139
    %v402 = vunpack.c.l.b16 %v140
    %v403 = vunpack.c.l.b16 %v141
    %v404 = vunpack.c.l.b16 %v142
    %v405 = vunpack.c.l.b16 %v143
    %v406 = vunpack.c.l.b16 %v144
    %v407 = vunpack.c.l.b16 %v145
    %v408 = vunpack.c.l.b16 %v146
    %v409 = vunpack.c.l.b16 %v147
    %v410 = vunpack.c.l.b16 %v148
    %v411 = vunpack.c.l.b16 %v149
    %v412 = vunpack.c.l.b16 %v150
    %v413 = vunpack.c.l.b16 %v151
    %v414 = vunpack.c.l.b16 %v152
    %v415 = vunpack.c.l.b16 %v153
    %v416 = vunpack.c.l.b16 %v154
    %v417 = vunpack.c.l.b16 %v155
    %v418 = vunpack.c.l.b16 %v156
    %v419 = vunpack.c.l.b16 %v157
    %v420 = vunpack.c.l.b16 %v158
    %v421 = vunpack.c.l.b16 %v159
    %v422 = vunpack.c.l.b16 %v160
    %v423 = vunpack.c.l.b16 %v161
    %v424 = vunpack.c.l.b16 %v162
    %v425 = vunpack.c.l.b16 %v163
    %v426 = vunpack.c.l.b16 %v164
    %v427 = vunpack.c.l.b16 %v165
    %v428 = vunpack.c.l.b16 %v166
    %v429 = vunpack.c.l.b16 %v167
    %v430 = vunpack.c.l.b16 %v168
    %v431 = vunpack.c.l.b16 %v169
    %v432 = vunpack.c.l.b16 %v170
    %v433 = vunpack.c.l.b16 %v171
    %v434 = vunpack.c.l.b16 %v172
    %v435 = vunpack.c.l.b16 %v173
    %v436 = vunpack.c.l.b16 %v174
    %v437 = vunpack.c.l.b16 %v175
    %v438 = vunpack.c.l.b16 %v176
    %v439 = vunpack.c.l.b16 %v177
    %v440 = vunpack.c.l.b16 %v178
    %v441 = vunpack.c.l.b16 %v179
    %v442 = vunpack.c.l.b16 %v180
    %v443 = vunpack.c.l.b16 %v181
    %v444 = vunpack.c.l.b16 %v182
    %v445 = vunpack.c.l.b16 %v183
    %v446 = vunpack.c.l.b16 %v184
    %v447 = vunpack.c.l.b16 %v185
    %v448 = vunpack.c.l.b16 %v186
    %v449 = vunpack.c.l.b16 %v187
    %v450 = vunpack.c.l.b16 %v188
    %v451 = vunpack.c.l.b16 %v189
    %v452 = vunpack.c.l.b16 %v190
    %v453 = vunpack.c.l.b16 %v191
    %v454 = vunpack.c.l.b16 %v192
    %v455 = vunpack.c.l.b16 %v193
    %v456 = vunpack.c.l.b16 %v194
    %v457 = vunpack.c.l.b16 %v195
    %v458 = vunpack.c.l.b16 %v196
    %v459 = vunpack.c.l.b16 %v197
    %v460 = vpack.c.b16 %v333, %v332
    %v461 = vpack.c.b16 %v335, %v334
    %v462 = vpack.c.b16 %v337, %v336
    %v463 = vpack.c.b16 %v339, %v338
    %v464 = vpack.c.b16 %v341, %v340
    %v465 = vpack.c.b16 %v343, %v342
    %v466 = vpack.c.b16 %v345, %v344
    %v467 = vpack.c.b16 %v347, %v346
    %v468 = vpack.c.b16 %v349, %v348
    %v469 = vpack.c.b16 %v351, %v350
    %v470 = vpack.c.b16 %v353, %v352
    %v471 = vpack.c.b16 %v355, %v354
    %v472 = vpack.c.b16 %v357, %v356
    %v473 = vpack.c.b16 %v359, %v358
    %v474 = vpack.c.b16 %v361, %v360
    %v475 = vpack.c.b16 %v363, %v362
    %v476 = vpack.c.b16 %v365, %v364
    %v477 = vpack.c.b16 %v367, %v366
    %v478 = vpack.c.b16 %v369, %v368
    %v479 = vpack.c.b16 %v371, %v370
    %v480 = vpack.c.b16 %v373, %v372
    %v481 = vpack.c.b16 %v375, %v374
    %v482 = vpack.c.b16 %v377, %v376
    %v483 = vpack.c.b16 %v379, %v378
    %v484 = vpack.c.b16 %v381, %v380
    %v485 = vpack.c.b16 %v383, %v382
    %v486 = vpack.c.b16 %v385, %v384
    %v487 = vpack.c.b16 %v387, %v386
    %v488 = vpack.c.b16 %v389, %v388
    %v489 = vpack.c.b16 %v391, %v390
    %v490 = vpack.c.b16 %v393, %v392
    %v491 = vpack.c.b16 %v395, %v394
    %v492 = vpack.c.b16 %v397, %v396
    %v493 = vpack.c.b16 %v399, %v398
    %v494 = vpack.c.b16 %v401, %v400
    %v495 = vpack.c.b16 %v403, %v402
    %v496 = vpack.c.b16 %v405, %v404
    %v497 = vpack.c.b16 %v407, %v406
    %v498 = vpack.c.b16 %v409, %v408
    %v499 = vpack.c.b16 %v411, %v410
    %v500 = vpack.c.b16 %v413, %v412
    %v501 = vpack.c.b16 %v415, %v414
    %v502 = vpack.c.b16 %v417, %v416
    %v503 = vpack.c.b16 %v419, %v418
    %v504 = vpack.c.b16 %v421, %v420
    %v505 = vpack.c.b16 %v423, %v422
    %v506 = vpack.c.b16 %v425, %v424
    %v507 = vpack.c.b16 %v427, %v426
    %v508 = vpack.c.b16 %v429, %v428
    %v509 = vpack.c.b16 %v431, %v430
    %v510 = vpack.c.b16 %v433, %v432
    %v511 = vpack.c.b16 %v435, %v434
    %v512 = vpack.c.b16 %v437, %v436
    %v513 = vpack.c.b16 %v439, %v438
    %v514 = vpack.c.b16 %v441, %v440
    %v515 = vpack.c.b16 %v443, %v442
    %v516 = vpack.c.b16 %v445, %v444
    %v517 = vpack.c.b16 %v447, %v446
    %v518 = vpack.c.b16 %v449, %v448
    %v519 = vpack.c.b16 %v451, %v450
    %v520 = vpack.c.b16 %v453, %v452
    %v521 = vpack.c.b16 %v455, %v454
    %v522 = vpack.c.b16 %v457, %v456
    %v523 = vpack.c.b16 %v459, %v458
    %588 = vmatprep.subr.bf16.mxu0 0
    %589 = vmatpush1.bf16.msra.mxu0 %v460
    %590 = vmatprep.subr.bf16.mxu0 0
    %591 = vmatpush1.bf16.msra.mxu0 %v461
    %592 = vmatprep.subr.bf16.mxu0 0
    %593 = vmatpush1.bf16.msra.mxu0 %v462
    %594 = vmatprep.subr.bf16.mxu0 0
    %595 = vmatpush1.bf16.msra.mxu0 %v463
    %596 = vmatprep.subr.bf16.mxu0 0
    %597 = vmatpush1.bf16.msra.mxu0 %v464
    %598 = vmatprep.subr.bf16.mxu0 0
    %599 = vmatpush1.bf16.msra.mxu0 %v465
    %600 = vmatprep.subr.bf16.mxu0 0
    %601 = vmatpush1.bf16.msra.mxu0 %v466
    %602 = vmatprep.subr.bf16.mxu0 0
    %603 = vmatpush1.bf16.msra.mxu0 %v467
    %604 = vmatprep.subr.bf16.mxu0 0
    %605 = vmatpush1.bf16.msra.mxu0 %v468
    %606 = vmatprep.subr.bf16.mxu0 0
    %607 = vmatpush1.bf16.msra.mxu0 %v469
    %608 = vmatprep.subr.bf16.mxu0 0
    %609 = vmatpush1.bf16.msra.mxu0 %v470
    %610 = vmatprep.subr.bf16.mxu0 0
    %611 = vmatpush1.bf16.msra.mxu0 %v471
    %612 = vmatprep.subr.bf16.mxu0 0
    %613 = vmatpush1.bf16.msra.mxu0 %v472
    %614 = vmatprep.subr.bf16.mxu0 0
    %615 = vmatpush1.bf16.msra.mxu0 %v473
    %616 = vmatprep.subr.bf16.mxu0 0
    %617 = vmatpush1.bf16.msra.mxu0 %v474
    %618 = vmatprep.subr.bf16.mxu0 0
    %619 = vmatpush1.bf16.msra.mxu0 %v475
    %620 = vmatprep.mubr.bf16.mxu0 %v63
    %621 = vmatmul.mubr.bf16.gmra.mrb[0].mxu0 %v62
    %v622 = vpop.f32.mrb[0].mxu0
    %v623 = vadd.f32 %v203, %v622
    %v624 = vpop.f32.mrb[0].mxu0
    %v625 = vpop.f32.mrb[0].mxu0
    %v626 = vpop.f32.mrb[0].mxu0
    %627 = vdwg.mxu0
    %628 = vmatprep.subr.bf16.mxu0 0
    %629 = vmatpush1.bf16.msra.mxu0 %v476
    %630 = vmatprep.subr.bf16.mxu0 0
    %631 = vmatpush1.bf16.msra.mxu0 %v477
    %632 = vmatprep.subr.bf16.mxu0 0
    %633 = vmatpush1.bf16.msra.mxu0 %v478
    %634 = vmatprep.subr.bf16.mxu0 0
    %635 = vmatpush1.bf16.msra.mxu0 %v479
    %636 = vmatprep.subr.bf16.mxu0 0
    %637 = vmatpush1.bf16.msra.mxu0 %v480
    %638 = vmatprep.subr.bf16.mxu0 0
    %639 = vmatpush1.bf16.msra.mxu0 %v481
    %640 = vmatprep.subr.bf16.mxu0 0
    %641 = vmatpush1.bf16.msra.mxu0 %v482
    %642 = vmatprep.subr.bf16.mxu0 0
    %643 = vmatpush1.bf16.msra.mxu0 %v483
    %644 = vmatprep.subr.bf16.mxu0 0
    %645 = vmatpush1.bf16.msra.mxu0 %v484
    %646 = vmatprep.subr.bf16.mxu0 0
    %647 = vmatpush1.bf16.msra.mxu0 %v485
    %648 = vmatprep.subr.bf16.mxu0 0
    %649 = vmatpush1.bf16.msra.mxu0 %v486
    %650 = vmatprep.subr.bf16.mxu0 0
    %651 = vmatpush1.bf16.msra.mxu0 %v487
    %652 = vmatprep.subr.bf16.mxu0 0
    %653 = vmatpush1.bf16.msra.mxu0 %v488
    %654 = vmatprep.subr.bf16.mxu0 0
    %655 = vmatpush1.bf16.msra.mxu0 %v489
    %656 = vmatprep.subr.bf16.mxu0 0
    %657 = vmatpush1.bf16.msra.mxu0 %v490
    %658 = vmatprep.subr.bf16.mxu0 0
    %659 = vmatpush1.bf16.msra.mxu0 %v491
    %660 = vmatprep.mubr.bf16.mxu0 %v65
    %661 = vmatmul.mubr.bf16.gmra.mrb[0].mxu0 %v64
    %v662 = vpop.f32.mrb[0].mxu0
    %v663 = vadd.f32 %v623, %v662
    %v664 = vpop.f32.mrb[0].mxu0
    %v665 = vpop.f32.mrb[0].mxu0
    %v666 = vpop.f32.mrb[0].mxu0
    %667 = vdwg.mxu0
    %668 = vmatprep.subr.bf16.mxu0 0
    %669 = vmatpush1.bf16.msra.mxu0 %v492
    %670 = vmatprep.subr.bf16.mxu0 0
    %671 = vmatpush1.bf16.msra.mxu0 %v493
    %672 = vmatprep.subr.bf16.mxu0 0
    %673 = vmatpush1.bf16.msra.mxu0 %v494
    %674 = vmatprep.subr.bf16.mxu0 0
    %675 = vmatpush1.bf16.msra.mxu0 %v495
    %676 = vmatprep.subr.bf16.mxu0 0
    %677 = vmatpush1.bf16.msra.mxu0 %v496
    %678 = vmatprep.subr.bf16.mxu0 0
    %679 = vmatpush1.bf16.msra.mxu0 %v497
    %680 = vmatprep.subr.bf16.mxu0 0
    %681 = vmatpush1.bf16.msra.mxu0 %v498
    %682 = vmatprep.subr.bf16.mxu0 0
    %683 = vmatpush1.bf16.msra.mxu0 %v499
    %684 = vmatprep.subr.bf16.mxu0 0
    %685 = vmatpush1.bf16.msra.mxu0 %v500
    %686 = vmatprep.subr.bf16.mxu0 0
    %687 = vmatpush1.bf16.msra.mxu0 %v501
    %688 = vmatprep.subr.bf16.mxu0 0
    %689 = vmatpush1.bf16.msra.mxu0 %v502
    %690 = vmatprep.subr.bf16.mxu0 0
    %691 = vmatpush1.bf16.msra.mxu0 %v503
    %692 = vmatprep.subr.bf16.mxu0 0
    %693 = vmatpush1.bf16.msra.mxu0 %v504
    %694 = vmatprep.subr.bf16.mxu0 0
    %695 = vmatpush1.bf16.msra.mxu0 %v505
    %696 = vmatprep.subr.bf16.mxu0 0
    %697 = vmatpush1.bf16.msra.mxu0 %v506
    %698 = vmatprep.subr.bf16.mxu0 0
    %699 = vmatpush1.bf16.msra.mxu0 %v507
    %700 = vmatprep.mubr.bf16.mxu0 %v67
    %701 = vmatmul.mubr.bf16.gmra.mrb[0].mxu0 %v66
    %v702 = vpop.f32.mrb[0].mxu0
    %v703 = vadd.f32 %v663, %v702
    %v704 = vpop.f32.mrb[0].mxu0
    %v705 = vpop.f32.mrb[0].mxu0
    %v706 = vpop.f32.mrb[0].mxu0
    %707 = vdwg.mxu0
    %708 = vmatprep.subr.bf16.mxu0 0
    %709 = vmatpush1.bf16.msra.mxu0 %v508
    %710 = vmatprep.subr.bf16.mxu0 0
    %711 = vmatpush1.bf16.msra.mxu0 %v509
    %712 = vmatprep.subr.bf16.mxu0 0
    %713 = vmatpush1.bf16.msra.mxu0 %v510
    %714 = vmatprep.subr.bf16.mxu0 0
    %715 = vmatpush1.bf16.msra.mxu0 %v511
    %716 = vmatprep.subr.bf16.mxu0 0
    %717 = vmatpush1.bf16.msra.mxu0 %v512
    %718 = vmatprep.subr.bf16.mxu0 0
    %719 = vmatpush1.bf16.msra.mxu0 %v513
    %720 = vmatprep.subr.bf16.mxu0 0
    %721 = vmatpush1.bf16.msra.mxu0 %v514
    %722 = vmatprep.subr.bf16.mxu0 0
    %723 = vmatpush1.bf16.msra.mxu0 %v515
    %724 = vmatprep.subr.bf16.mxu0 0
    %725 = vmatpush1.bf16.msra.mxu0 %v516
    %726 = vmatprep.subr.bf16.mxu0 0
    %727 = vmatpush1.bf16.msra.mxu0 %v517
    %728 = vmatprep.subr.bf16.mxu0 0
    %729 = vmatpush1.bf16.msra.mxu0 %v518
    %730 = vmatprep.subr.bf16.mxu0 0
    %731 = vmatpush1.bf16.msra.mxu0 %v519
    %732 = vmatprep.subr.bf16.mxu0 0
    %733 = vmatpush1.bf16.msra.mxu0 %v520
    %734 = vmatprep.subr.bf16.mxu0 0
    %735 = vmatpush1.bf16.msra.mxu0 %v521
    %736 = vmatprep.subr.bf16.mxu0 0
    %737 = vmatpush1.bf16.msra.mxu0 %v522
    %738 = vmatprep.subr.bf16.mxu0 0
    %739 = vmatpush1.bf16.msra.mxu0 %v523
    %740 = vmatprep.mubr.bf16.mxu0 %v69
    %741 = vmatmul.mubr.bf16.gmra.mrb[0].mxu0 %v68
    %v742 = vpop.f32.mrb[0].mxu0
    %v743 = vadd.f32 %v703, %v742
    %v744 = vpop.f32.mrb[0].mxu0
    %v745 = vpop.f32.mrb[0].mxu0
    %v746 = vpop.f32.mrb[0].mxu0
    %747 = vdwg.mxu0
    %v748 = vmax.f32 %v743, 0.0
    %v749 = vpack.c.bf16 %v748, %v748
    %v750 = vld [vmem:[%s2] sm:$0xf]
    %v751 = vld [vmem:[%s2 + $0x4] sm:$0xf]
    %v752 = vld [vmem:[%s2 + $0x8] sm:$0xf]
    %v753 = vld [vmem:[%s2 + $0xc] sm:$0xf]
    %v754 = vld [vmem:[%s2 + $0x10] sm:$0x1]
    %v755 = vunpack.c.l.bf16 %v754
    %v756 = vlaneseq
    %v757 = vshrl.u32 %v756, 7
    %v758 = vsub.s32 0, %v757
    %v759 = vrot.slane %v755, %v758
    %v764 = vunpack.c.l.b16 %v750
    %v765 = vunpack.c.l.b16 %v751
    %v766 = vunpack.c.l.b16 %v752
    %v767 = vunpack.c.l.b16 %v753
    %v768 = vpack.c.b16 %v765, %v764
    %v769 = vpack.c.b16 %v767, %v766
    %vm772 = vcmask 261120
    %v774 = vsel %vm772, %v749, 0
    %776 = vmatprep.subr.bf16.mxu0 0
    %777 = vmatpush1.bf16.msra.mxu0 %v768
    %778 = vmatprep.subr.bf16.mxu0 0
    %779 = vmatpush1.bf16.msra.mxu0 %v769
    %780 = vmatprep.subr.bf16.mxu0 0
    %781 = vmatpush1.bf16.msra.mxu0 0
    %782 = vmatprep.subr.bf16.mxu0 0
    %783 = vmatpush1.bf16.msra.mxu0 0
    %784 = vmatprep.subr.bf16.mxu0 0
    %785 = vmatpush1.bf16.msra.mxu0 0
    %786 = vmatprep.subr.bf16.mxu0 0
    %787 = vmatpush1.bf16.msra.mxu0 0
    %788 = vmatprep.subr.bf16.mxu0 0
    %789 = vmatpush1.bf16.msra.mxu0 0
    %790 = vmatprep.subr.bf16.mxu0 0
    %791 = vmatpush1.bf16.msra.mxu0 0
    %792 = vmatprep.subr.bf16.mxu0 0
    %793 = vmatpush1.bf16.msra.mxu0 0
    %794 = vmatprep.subr.bf16.mxu0 0
    %795 = vmatpush1.bf16.msra.mxu0 0
    %796 = vmatprep.subr.bf16.mxu0 0
    %797 = vmatpush1.bf16.msra.mxu0 0
    %798 = vmatprep.subr.bf16.mxu0 0
    %799 = vmatpush1.bf16.msra.mxu0 0
    %800 = vmatprep.subr.bf16.mxu0 0
    %801 = vmatpush1.bf16.msra.mxu0 0
    %802 = vmatprep.subr.bf16.mxu0 0
    %803 = vmatpush1.bf16.msra.mxu0 0
    %804 = vmatprep.subr.bf16.mxu0 0
    %805 = vmatpush1.bf16.msra.mxu0 0
    %806 = vmatprep.subr.bf16.mxu0 0
    %807 = vmatpush1.bf16.msra.mxu0 0
    %808 = vmatprep.mubr.bf16.mxu0 0
    %809 = vmatmul.mubr.bf16.gmra.mrb[0].mxu0 %v774
    %v810 = vpop.f32.mrb[0].mxu0
    %v811 = vadd.f32 %v759, %v810
    %v812 = vpop.f32.mrb[0].mxu0
    %v813 = vpop.f32.mrb[0].mxu0
    %v814 = vpop.f32.mrb[0].mxu0
    %815 = vdwg.mxu0
    %816 = vst [vmem:[#allocation2] sm:$0x3] %v811
    // Predicated region
    $region14: #{_forward.1} parent=1 // pred_check
      _
    $region15: #{_forward.1} parent=1 // pred_check_branch
      %818 = sbr.rel (0) target = $region17
    $region16: #{_forward.1} parent=1 // pred_region
      %s820 = ssub.s32 32, 32
      %821 = vsyncadd [#allocation3], %s820
      %s823 = sshll.u32 [#allocation2], 4
      %s824 = int_to_ptr.vmem [resolvable:$true] %s823
      %826 = dma.vmem_to_hbm [thread:$0]  %s824, 32, %s3, [#allocation3]
    $region17: #{_forward.1} parent=1 // pred_fallthru
      _
    // Predicated region
    $region18: #{_forward.1} parent=1 // pred_check
      _
    $region19: #{_forward.1} parent=1 // pred_check_branch
      %828 = sbr.rel (0) target = $region21
    $region20: #{_forward.1} parent=1 // pred_region
      %829 = dma.done [#allocation3], 32
    $region21: #{_forward.1} parent=1 // pred_fallthru
      _
    %830 = vsyncpa [#allocation3], 1

</llo_original>
